<compile_context>
chip_gen: v6e
topology: v6e:2x2x1
jax: 0.10.0
libtpu: 0.0.40
codegen_flags: <defaults>
</compile_context>

<pallas_src>
import jax
import jax.numpy as jnp
from jax.experimental import pallas as pl
from jax.experimental.pallas import tpu as pltpu


def _round_up(x: int, m: int) -> int:
    return (x + m - 1) // m * m


def _pca_kernel_single(x_ref, w_ref, b_ref, o_ref):
    # D fits in one step: fused MXU GEMM (f32 acc) + bias subtract.
    o_ref[...] = (
        jnp.dot(x_ref[...], w_ref[...], preferred_element_type=jnp.float32)
        - b_ref[...]
    )


def _pca_kernel_multi(x_ref, w_ref, b_ref, o_ref):
    # D split across grid axis 1 ("arbitrary"): the output block index is the
    # same for every D-step, so o_ref stays resident in VMEM and acts as the
    # f32 accumulator.  Initialize with -bias, then accumulate partial GEMMs.
    @pl.when(pl.program_id(1) == 0)
    def _init():
        o_ref[...] = jnp.broadcast_to(-b_ref[...], o_ref.shape)

    o_ref[...] += jnp.dot(x_ref[...], w_ref[...],
                          preferred_element_type=jnp.float32)


def pca_forward(x, scale_mean, scale, mean, components, explained_variance,
                *, has_scale=True, whiten=True,
                max_tm=1024, vmem_budget_bytes=32 << 20):
    """Pallas-backed PCA transform.

    x: [N, D] float32
    scale_mean, scale: [D] float32 (ignored if has_scale=False)
    mean: [D] (or broadcastable) float32
    components: [D, K] float32 (pca_model.components_.T)
    explained_variance: [K] float32 (ignored if whiten=False)
    """
    x = jnp.asarray(x, jnp.float32)
    N, D = x.shape
    K = components.shape[1]

    # ---- fold standardize / center / whiten into the GEMM -------------------
    comp = jnp.asarray(components, jnp.float32)
    if whiten:
        comp = comp * jax.lax.rsqrt(
            jnp.asarray(explained_variance, jnp.float32))[None, :]
    if has_scale:
        inv_scale = 1.0 / jnp.asarray(scale, jnp.float32)
        w = comp * inv_scale[:, None]
        offset = (jnp.asarray(scale_mean, jnp.float32) * inv_scale
                  + jnp.broadcast_to(jnp.asarray(mean, jnp.float32), (D,)))
    else:
        w = comp
        offset = jnp.broadcast_to(jnp.asarray(mean, jnp.float32), (D,))
    # One-time tiny GEMV; do it at full precision so the folded bias is exact.
    bias = jnp.dot(offset, comp,
                   precision=jax.lax.Precision.HIGHEST).reshape(1, K)

    # ---- pad K to a lane-dense multiple of 128 -------------------------------
    K_pad = max(_round_up(K, 128), 128)
    if K_pad != K:
        w = jnp.pad(w, ((0, 0), (0, K_pad - K)))
        bias = jnp.pad(bias, ((0, 0), (0, K_pad - K)))

    # ---- choose row tile TM and feature tile TD under the VMEM budget -------
    D128 = max(_round_up(D, 128), 128)

    def vmem_bytes(tm, td):
        # double-buffered x / w / out tiles + (tiny) resident bias, all f32
        return 4 * (2 * tm * td + 2 * td * K_pad + 2 * tm * K_pad + 2 * K_pad)

    TM = max(_round_up(min(N, int(max_tm)), 8), 8)
    TD = D128
    # Prefer keeping the whole (padded) feature dim resident: shrink TM first
    # (down to 256), then split D, then shrink TM further if still needed.
    while vmem_bytes(TM, TD) > vmem_budget_bytes and TM > 256:
        TM = max(256, (TM // 2 // 8) * 8)
    while vmem_bytes(TM, TD) > vmem_budget_bytes and TD > 128:
        TD = max(128, _round_up(TD // 2, 128))
    while vmem_bytes(TM, TD) > vmem_budget_bytes and TM > 8:
        TM = max(8, (TM // 2 // 8) * 8)

    # ---- pad N and D so every grid block is full -----------------------------
    N_pad = _round_up(N, TM)
    D_pad = _round_up(D, TD)
    if (N_pad, D_pad) != (N, D):
        x = jnp.pad(x, ((0, N_pad - N), (0, D_pad - D)))
    if D_pad != D:
        w = jnp.pad(w, ((0, D_pad - D), (0, 0)))

    grid_m = N_pad // TM
    grid_d = D_pad // TD
    kernel = _pca_kernel_single if grid_d == 1 else _pca_kernel_multi

    needed = vmem_bytes(TM, TD)
    vmem_limit = int(min(max(needed * 5 // 4, 16 << 20), 48 << 20))

    out = pl.pallas_call(
        kernel,
        out_shape=jax.ShapeDtypeStruct((N_pad, K_pad), jnp.float32),
        grid=(grid_m, grid_d),
        in_specs=[
            pl.BlockSpec((TM, TD), lambda i, k: (i, k)),     # x: streamed tiles
            pl.BlockSpec((TD, K_pad), lambda i, k: (k, 0)),  # folded components
            pl.BlockSpec((1, K_pad), lambda i, k: (0, 0)),   # folded bias (resident)
        ],
        out_specs=pl.BlockSpec((TM, K_pad), lambda i, k: (i, 0)),
        compiler_params=pltpu.CompilerParams(
            dimension_semantics=("parallel", "arbitrary"),
            vmem_limit_bytes=vmem_limit,
        ),
        cost_estimate=pl.CostEstimate(
            flops=2 * N_pad * D_pad * K_pad,
            transcendentals=0,
            bytes_accessed=4 * (N_pad * D_pad + grid_m * D_pad * K_pad
                                + N_pad * K_pad),
        ),
    )(x, w, bias)

    return out[:N, :K]


def pca_forward_ref(x, scale_mean, scale, mean, components, explained_variance,
                    *, has_scale=True, whiten=True):
    """Pure-JAX reference mirroring the PyTorch forward exactly."""
    if has_scale:
        x = (x - scale_mean) / scale
    x = x - mean
    xt = jnp.dot(x, components, precision=jax.lax.Precision.HIGHEST)
    if whiten:
        xt = xt / jnp.sqrt(explained_variance)
    return xt


if __name__ == "__main__":
    key = jax.random.PRNGKey(0)

    # ---------------- small shapes: single-step (resident-weights) path ------
    N, D, K = 16, 32, 8   # samples, features, n_components
    k = jax.random.split(key, 6)
    x = jax.random.normal(k[0], (N, D), jnp.float32)
    scale_mean = jax.random.normal(k[1], (D,), jnp.float32)
    scale = jax.random.uniform(k[2], (D,), jnp.float32, 0.5, 2.0)
    mean = jax.random.normal(k[3], (D,), jnp.float32)
    components = jax.random.normal(k[4], (D, K), jnp.float32) / jnp.sqrt(D)
    explained_variance = jax.random.uniform(k[5], (K,), jnp.float32, 0.1, 3.0)

    out = pca_forward(x, scale_mean, scale, mean, components, explained_variance,
                      has_scale=True, whiten=True)
    out = jax.block_until_ready(out)
    ref = pca_forward_ref(x, scale_mean, scale, mean, components,
                          explained_variance, has_scale=True, whiten=True)
    assert out.shape == (N, K)
    assert jnp.allclose(out, ref, atol=1e-3, rtol=1e-3), "mismatch (scale+whiten)"

    out2 = pca_forward(x, scale_mean, scale, mean, components, explained_variance,
                       has_scale=False, whiten=False)
    out2 = jax.block_until_ready(out2)
    ref2 = pca_forward_ref(x, scale_mean, scale, mean, components,
                           explained_variance, has_scale=False, whiten=False)
    assert jnp.allclose(out2, ref2, atol=1e-3, rtol=1e-3), "mismatch (plain PCA)"

    # ------------- force the D-split (accumulating) path with a tiny budget --
    N2, D2, K2 = 64, 512, 8
    k2 = jax.random.split(jax.random.PRNGKey(1), 6)
    x2 = jax.random.normal(k2[0], (N2, D2), jnp.float32)
    scale_mean2 = jax.random.normal(k2[1], (D2,), jnp.float32)
    scale2 = jax.random.uniform(k2[2], (D2,), jnp.float32, 0.5, 2.0)
    mean2 = jax.random.normal(k2[3], (D2,), jnp.float32)
    components2 = jax.random.normal(k2[4], (D2, K2), jnp.float32) / jnp.sqrt(D2)
    explained_variance2 = jax.random.uniform(k2[5], (K2,), jnp.float32, 0.1, 3.0)

    out3 = pca_forward(x2, scale_mean2, scale2, mean2, components2,
                       explained_variance2, has_scale=True, whiten=True,
                       vmem_budget_bytes=300 * 1024)
    out3 = jax.block_until_ready(out3)
    ref3 = pca_forward_ref(x2, scale_mean2, scale2, mean2, components2,
                           explained_variance2, has_scale=True, whiten=True)
    assert out3.shape == (N2, K2)
    assert jnp.allclose(out3, ref3, atol=2e-3, rtol=2e-3), "mismatch (D-split path)"

    print("KERNEL_OK")
</pallas_src>

<mosaic_0001>
module attributes {stable_mosaic.version = 11 : i64} {
  func.func @_pca_kernel_single(%arg0: i32, %arg1: i32, %arg2: memref<16x128xf32, #tpu.memory_space<vmem>>, %arg3: memref<128x128xf32, #tpu.memory_space<vmem>>, %arg4: memref<1x128xf32, #tpu.memory_space<vmem>>, %arg5: memref<16x128xf32, #tpu.memory_space<vmem>>) attributes {dimension_semantics = [#tpu.dimension_semantics<parallel>, #tpu.dimension_semantics<arbitrary>], iteration_bounds = array<i64: 1, 1>, scalar_prefetch = 0 : i64, scratch_operands = 0 : i64, tpu.core_type = #tpu.core_type<tc>, window_params = [{transform_indices = @transform_0, window_bounds = array<i64: 16, 128>}, {transform_indices = @transform_1, window_bounds = array<i64: 128, 128>}, {pipeline_mode = #tpu.pipeline_mode<synchronous>, transform_indices = @transform_2, window_bounds = array<i64: 1, 128>}, {transform_indices = @transform_3, window_bounds = array<i64: 16, 128>}]} {
    %c0 = arith.constant 0 : index
    %c0_0 = arith.constant 0 : index
    %0 = vector.load %arg2[%c0, %c0_0] : memref<16x128xf32, #tpu.memory_space<vmem>>, vector<16x128xf32>
    %c0_1 = arith.constant 0 : index
    %c0_2 = arith.constant 0 : index
    %1 = vector.load %arg3[%c0_1, %c0_2] : memref<128x128xf32, #tpu.memory_space<vmem>>, vector<128x128xf32>
    %cst = arith.constant dense<0.000000e+00> : vector<16x128xf32>
    %2 = tpu.matmul %0, %1, %cst {dimension_numbers = #tpu.dot_dimension_numbers<[1], [0], [0], [1], [0, 0, 1, 1], [], []>} : vector<16x128xf32>, vector<128x128xf32>, vector<16x128xf32> -> vector<16x128xf32>
    %c0_3 = arith.constant 0 : index
    %c0_4 = arith.constant 0 : index
    %3 = vector.load %arg4[%c0_3, %c0_4] : memref<1x128xf32, #tpu.memory_space<vmem>>, vector<1x128xf32>
    %4 = vector.broadcast %3 : vector<1x128xf32> to vector<16x128xf32>
    %5 = arith.subf %2, %4 : vector<16x128xf32>
    %c0_5 = arith.constant 0 : index
    %c0_6 = arith.constant 0 : index
    %6 = vector.load %arg5[%c0_5, %c0_6] : memref<16x128xf32, #tpu.memory_space<vmem>>, vector<16x128xf32>
    tpu.vector_store %arg5[%c0_5, %c0_6], %5 {strides = array<i32>} : memref<16x128xf32, #tpu.memory_space<vmem>>, vector<16x128xf32>,
    return
  }
  func.func @transform_0(%arg0: i32, %arg1: i32) -> (i32, i32) {
    %c0_i32 = arith.constant 0 : i32
    return %arg0, %arg1 : i32, i32
  }
  func.func @transform_1(%arg0: i32, %arg1: i32) -> (i32, i32) {
    %c0_i32 = arith.constant 0 : i32
    %c0_i32_0 = arith.constant 0 : i32
    return %arg1, %c0_i32 : i32, i32
  }
  func.func @transform_2(%arg0: i32, %arg1: i32) -> (i32, i32) {
    %c0_i32 = arith.constant 0 : i32
    %c0_i32_0 = arith.constant 0 : i32
    %c0_i32_1 = arith.constant 0 : i32
    return %c0_i32, %c0_i32_0 : i32, i32
  }
  func.func @transform_3(%arg0: i32, %arg1: i32) -> (i32, i32) {
    %c0_i32 = arith.constant 0 : i32
    %c0_i32_0 = arith.constant 0 : i32
    return %arg0, %c0_i32 : i32, i32
  }
}

</mosaic_0001>

<llo_original>
// kernel: tpu_custom_call.1
$region0: #{tpu_custom_call.1}
  #allocation0 [shape = 'u32[]', space=smem, size = 0x4, offset = 0x4, fixed_abs, tag = 'smem constant byte address 0x4 - core index']
  #allocation1 [shape = 'u32[144,128]{1,0:T(1,128)}', space=vmem, size = 0x12000, scoped, tag = 'internal scratch']
  %s0 = inlined_call_operand.hbm [shape: f32[16,128], index: 0, kind: input, shape index: {}]
  %s1 = inlined_call_operand.hbm [shape: f32[128,128], index: 1, kind: input, shape index: {}]
  %s2 = inlined_call_operand.vmem [shape: f32[1,128], index: 2, kind: input, shape index: {}]
  %s3 = inlined_call_operand.hbm [shape: f32[16,128], index: 3, kind: output, shape index: {}]
  %s4 = sld [smem:[#allocation0]]
  $region30: #{tpu_custom_call.1} parent=0
    _
  %s6 = ssub.s32 1, %s4
  %s7 = scalar_select 0, %s6, %s4
  $region1: #{tpu_custom_call.1} parent=0
    #allocation2 [shape = 'u8[8192]{0}', space=vmem, size = 0x2000, scoped, tag = 'input window, operand 0, single buffered']
    #allocation3 [shape = 's32[1]{0}', space=sflag, size = 0x4, scoped, tag = 'scoped memory for tpu_custom_call.1']
    #allocation4 [shape = 's32[1]{0}', space=sflag, size = 0x4, scoped, tag = 'scoped memory for tpu_custom_call.1']
    #allocation5 [shape = 'u8[65536]{0}', space=vmem, size = 0x10000, scoped, tag = 'input window, operand 1, single buffered']
    #allocation6 [shape = 's32[1]{0}', space=sflag, size = 0x4, scoped, tag = 'scoped memory for tpu_custom_call.1']
    #allocation7 [shape = 'u8[8192]{0}', space=vmem, size = 0x2000, scoped, tag = 'output window, operand 0, single buffered']
    %8 = vsyncpa [#allocation3], 0
    %9 = vsyncpa [#allocation6], 0
    %10 = vsyncpa [#allocation4], 0
    // Predicated region
    $region2: #{tpu_custom_call.1} parent=1 // pred_check
      _
    $region3: #{tpu_custom_call.1} parent=1 // pred_check_branch
      %12 = sbr.rel (0) target = $region5
    $region4: #{tpu_custom_call.1} parent=1 // pred_region
      %s14 = ssub.s32 256, 256
      %15 = vsyncadd [#allocation3], %s14
      %s16 = sshll.u32 [#allocation2], 4
      %s17 = int_to_ptr.vmem [resolvable:$true] %s16
      %22 = dma.hbm_to_vmem [thread:$0]  %s0, 256, %s17, [#allocation3], 128, 128, 8
    $region5: #{tpu_custom_call.1} parent=1 // pred_fallthru
      _
    // Predicated region
    $region6: #{tpu_custom_call.1} parent=1 // pred_check
      _
    $region7: #{tpu_custom_call.1} parent=1 // pred_check_branch
      %24 = sbr.rel (0) target = $region9
    $region8: #{tpu_custom_call.1} parent=1 // pred_region
      %s26 = ssub.s32 2048, 2048
      %27 = vsyncadd [#allocation6], %s26
      %s28 = sshll.u32 [#allocation5], 4
      %s29 = int_to_ptr.vmem [resolvable:$true] %s28
      %34 = dma.hbm_to_vmem [thread:$0]  %s1, 2048, %s29, [#allocation6], 128, 128, 8
    $region9: #{tpu_custom_call.1} parent=1 // pred_fallthru
      _
    // Predicated region
    $region10: #{tpu_custom_call.1} parent=1 // pred_check
      _
    $region11: #{tpu_custom_call.1} parent=1 // pred_check_branch
      %36 = sbr.rel (0) target = $region13
    $region12: #{tpu_custom_call.1} parent=1 // pred_region
      _
    $region13: #{tpu_custom_call.1} parent=1 // pred_fallthru
      _
    // Predicated region
    $region14: #{tpu_custom_call.1} parent=1 // pred_check
      _
    $region15: #{tpu_custom_call.1} parent=1 // pred_check_branch
      %38 = sbr.rel (0) target = $region17
    $region16: #{tpu_custom_call.1} parent=1 // pred_region
      %39 = dma.done [#allocation3], 256
    $region17: #{tpu_custom_call.1} parent=1 // pred_fallthru
      _
    // Predicated region
    $region18: #{tpu_custom_call.1} parent=1 // pred_check
      _
    $region19: #{tpu_custom_call.1} parent=1 // pred_check_branch
      %41 = sbr.rel (0) target = $region21
    $region20: #{tpu_custom_call.1} parent=1 // pred_region
      %42 = dma.done [#allocation6], 2048
    $region21: #{tpu_custom_call.1} parent=1 // pred_fallthru
      _
    %v43 = vld [vmem:[#allocation2] sm:$0xff]
    %v44 = vld [vmem:[#allocation2 + $0x8] sm:$0xff]
    %v45 = vld [vmem:[#allocation5] sm:$0xff]
    %v46 = vld [vmem:[#allocation5 + $0x8] sm:$0xff]
    %v47 = vld [vmem:[#allocation5 + $0x10] sm:$0xff]
    %v48 = vld [vmem:[#allocation5 + $0x18] sm:$0xff]
    %v49 = vld [vmem:[#allocation5 + $0x20] sm:$0xff]
    %v50 = vld [vmem:[#allocation5 + $0x28] sm:$0xff]
    %v51 = vld [vmem:[#allocation5 + $0x30] sm:$0xff]
    %v52 = vld [vmem:[#allocation5 + $0x38] sm:$0xff]
    %v53 = vld [vmem:[#allocation5 + $0x40] sm:$0xff]
    %v54 = vld [vmem:[#allocation5 + $0x48] sm:$0xff]
    %v55 = vld [vmem:[#allocation5 + $0x50] sm:$0xff]
    %v56 = vld [vmem:[#allocation5 + $0x58] sm:$0xff]
    %v57 = vld [vmem:[#allocation5 + $0x60] sm:$0xff]
    %v58 = vld [vmem:[#allocation5 + $0x68] sm:$0xff]
    %v59 = vld [vmem:[#allocation5 + $0x70] sm:$0xff]
    %v60 = vld [vmem:[#allocation5 + $0x78] sm:$0xff]
    %61 = vmatprep.subr.mxu0 0.0
    %62 = vmatpush1.msra.mxu0 %v60
    %63 = vmatprep.subr.mxu0 0.0
    %64 = vmatpush1.msra.mxu0 %v59
    %65 = vmatprep.subr.mxu0 0.0
    %66 = vmatpush1.msra.mxu0 %v58
    %67 = vmatprep.subr.mxu0 0.0
    %68 = vmatpush1.msra.mxu0 %v57
    %69 = vmatprep.subr.mxu0 0.0
    %70 = vmatpush1.msra.mxu0 %v56
    %71 = vmatprep.subr.mxu0 0.0
    %72 = vmatpush1.msra.mxu0 %v55
    %73 = vmatprep.subr.mxu0 0.0
    %74 = vmatpush1.msra.mxu0 %v54
    %75 = vmatprep.subr.mxu0 0.0
    %76 = vmatpush1.msra.mxu0 %v53
    %77 = vmatprep.subr.mxu0 0.0
    %78 = vmatpush1.msra.mxu0 %v52
    %79 = vmatprep.subr.mxu0 0.0
    %80 = vmatpush1.msra.mxu0 %v51
    %81 = vmatprep.subr.mxu0 0.0
    %82 = vmatpush1.msra.mxu0 %v50
    %83 = vmatprep.subr.mxu0 0.0
    %84 = vmatpush1.msra.mxu0 %v49
    %85 = vmatprep.subr.mxu0 0.0
    %86 = vmatpush1.msra.mxu0 %v48
    %87 = vmatprep.subr.mxu0 0.0
    %88 = vmatpush1.msra.mxu0 %v47
    %89 = vmatprep.subr.mxu0 0.0
    %90 = vmatpush1.msra.mxu0 %v46
    %91 = vmatprep.subr.mxu0 0.0
    %92 = vmatpush1.msra.mxu0 %v45
    %93 = vmatprep.subr.mxu0 0.0
    %94 = vmatpush2.msra.mxu0 0.0
    %95 = vmatprep.subr.mxu0 0.0
    %96 = vmatpush2.msra.mxu0 0.0
    %97 = vmatprep.subr.mxu0 0.0
    %98 = vmatpush2.msra.mxu0 0.0
    %99 = vmatprep.subr.mxu0 0.0
    %100 = vmatpush2.msra.mxu0 0.0
    %101 = vmatprep.subr.mxu0 0.0
    %102 = vmatpush2.msra.mxu0 0.0
    %103 = vmatprep.subr.mxu0 0.0
    %104 = vmatpush2.msra.mxu0 0.0
    %105 = vmatprep.subr.mxu0 0.0
    %106 = vmatpush2.msra.mxu0 0.0
    %107 = vmatprep.subr.mxu0 0.0
    %108 = vmatpush2.msra.mxu0 0.0
    %109 = vmatprep.subr.mxu0 0.0
    %110 = vmatpush2.msra.mxu0 0.0
    %111 = vmatprep.subr.mxu0 0.0
    %112 = vmatpush2.msra.mxu0 0.0
    %113 = vmatprep.subr.mxu0 0.0
    %114 = vmatpush2.msra.mxu0 0.0
    %115 = vmatprep.subr.mxu0 0.0
    %116 = vmatpush2.msra.mxu0 0.0
    %117 = vmatprep.subr.mxu0 0.0
    %118 = vmatpush2.msra.mxu0 0.0
    %119 = vmatprep.subr.mxu0 0.0
    %120 = vmatpush2.msra.mxu0 0.0
    %121 = vmatprep.subr.mxu0 0.0
    %122 = vmatpush2.msra.mxu0 0.0
    %123 = vmatprep.subr.mxu0 0.0
    %124 = vmatpush2.msra.mxu0 0.0
    %125 = vmatprep.mubr.f32.mxu0 0.0
    %126 = vmatmul.mubr.f32.gmra.mxu0 %v43
    %v127 = vpop.f32.mrf.mxu0
    %v128 = vadd.f32 0.0, %v127
    %v129 = vpop.f32.mrf.mxu0
    %130 = vmatprep.mubr.f32.mxu0 0.0
    %131 = vmatmul.mubr.f32.gmra.mxu0 %v44
    %v132 = vpop.f32.mrf.mxu0
    %v133 = vadd.f32 0.0, %v132
    %v134 = vpop.f32.mrf.mxu0
    %135 = vdwg.mxu0
    %v136 = vld [vmem:[%s2] sm:$0x1]
    %v138 = vlaneseq
    %v139 = vshrl.u32 %v138, 7
    %v140 = vsub.s32 0, %v139
    %v141 = vrot.slane %v136, %v140
    %v143 = vsub.f32 %v128, %v141
    %v144 = vsub.f32 %v133, %v141
    %145 = vst [vmem:[#allocation7] sm:$0xff] %v143
    %146 = vst [vmem:[#allocation7 + $0x8] sm:$0xff] %v144
    // Predicated region
    $region22: #{tpu_custom_call.1} parent=1 // pred_check
      _
    $region23: #{tpu_custom_call.1} parent=1 // pred_check_branch
      %148 = sbr.rel (0) target = $region25
    $region24: #{tpu_custom_call.1} parent=1 // pred_region
      %s150 = ssub.s32 256, 256
      %151 = vsyncadd [#allocation4], %s150
      %s152 = sshll.u32 [#allocation7], 4
      %s153 = int_to_ptr.vmem [resolvable:$true] %s152
      %158 = dma.vmem_to_hbm [thread:$0]  %s153, 256, %s3, [#allocation4], 128, 128, 8
    $region25: #{tpu_custom_call.1} parent=1 // pred_fallthru
      _
    // Predicated region
    $region26: #{tpu_custom_call.1} parent=1 // pred_check
      _
    $region27: #{tpu_custom_call.1} parent=1 // pred_check_branch
      %160 = sbr.rel (0) target = $region29
    $region28: #{tpu_custom_call.1} parent=1 // pred_region
      %161 = dma.done [#allocation4], 256
    $region29: #{tpu_custom_call.1} parent=1 // pred_fallthru
      _
    %162 = vsyncpa [#allocation3], 1
    %163 = vsyncpa [#allocation6], 1
    %164 = vsyncpa [#allocation4], 1

</llo_original>
